<compile_context>
chip_gen: v6e
topology: v6e:2x2x1
jax: 0.10.0
libtpu: 0.0.40
codegen_flags: <defaults>
</compile_context>

<pallas_src>
import jax
import jax.numpy as jnp
import numpy as np
from jax.experimental import pallas as pl
from jax.experimental.pallas import tpu as pltpu


def word_score_kernel(x_ref, mask_ref, w_ref, out_ref):
    """Fused WordScore forward for one batch tile.

    x_ref    : [bt, S, D] f32   token features
    mask_ref : [bt, S]    f32   1.0 = valid token, 0.0 = padding (== torch bool mask)
    w_ref    : [1, D]     f32   nn.Linear(D, 1, bias=False).weight
    out_ref  : [bt, S]    f32   softmax attention scores
    """
    x = x_ref[...]                                   # [bt, S, D]
    w = w_ref[...]                                   # [1, D]
    mask = mask_ref[...]                             # [bt, S]
    d = x.shape[-1]

    # inner_product_layer: scores[b, s] = sum_d x[b, s, d] * w[d]
    # (VPU multiply + XLU lane-reduce; an MXU matmul with N=1 would waste the array.)
    scores = jnp.sum(x * w.reshape(1, 1, d), axis=-1)          # [bt, S]

    # torch.masked_fill(scores, ~masks, -1e8)
    masked = jnp.where(mask != 0, scores, jnp.float32(-100000000.0))

    # numerically stable softmax over the sequence axis
    m = jnp.max(masked, axis=-1, keepdims=True)                # [bt, 1]
    e = jnp.exp(masked - m)                                    # [bt, S]
    denom = jnp.sum(e, axis=-1, keepdims=True)                 # [bt, 1]
    # approx=True would move the divide onto the (mostly idle) EUP slot at the
    # cost of ~1e-3 relative error; keep the exact path so results bit-match
    # the f32 reference.
    out_ref[...] = e * pl.reciprocal(denom, approx=False)


def word_score(inputs, masks, weight, *, block_bz=None, vmem_limit_bytes=None):
    """JAX wrapper reproducing WordScore.forward -> out_scores [bz, seq_len]."""
    bz, seq_len, dim = inputs.shape
    x = jnp.asarray(inputs, jnp.float32)
    mask_f = jnp.asarray(masks).astype(jnp.float32)            # bool/float -> f32
    w = jnp.asarray(weight, jnp.float32).reshape(1, dim)       # torch weight is [1, dim]

    # Batch-tile size: keep 2x double-buffered (x + mask + out) tiles well inside a
    # conservative VMEM budget (fits v7x's 64 MiB scoped VMEM as well as v5e/v6e).
    if block_bz is None:
        bytes_per_batch_row = (seq_len * dim + 2 * seq_len) * 4
        budget = 8 * 1024 * 1024
        bt = max(8, min(256, budget // (2 * max(bytes_per_batch_row, 1))))
        bt = (bt // 8) * 8                                     # sublane multiple
        block_bz = bz if bz <= bt else bt
    grid = (pl.cdiv(bz, block_bz),)

    cost = pl.CostEstimate(
        flops=2 * bz * seq_len * dim + 6 * bz * seq_len,
        transcendentals=bz * seq_len,
        bytes_accessed=(x.size + mask_f.size + w.size + bz * seq_len) * 4,
    )

    cp_kwargs = dict(dimension_semantics=("parallel",))
    if vmem_limit_bytes is not None:
        cp_kwargs["vmem_limit_bytes"] = vmem_limit_bytes

    out = pl.pallas_call(
        word_score_kernel,
        out_shape=jax.ShapeDtypeStruct((bz, seq_len), jnp.float32),
        grid=grid,
        in_specs=[
            pl.BlockSpec((block_bz, seq_len, dim), lambda i: (i, 0, 0)),
            pl.BlockSpec((block_bz, seq_len), lambda i: (i, 0)),
            pl.BlockSpec((1, dim), lambda i: (0, 0)),
        ],
        out_specs=pl.BlockSpec((block_bz, seq_len), lambda i: (i, 0)),
        compiler_params=pltpu.CompilerParams(**cp_kwargs),
        cost_estimate=cost,
    )(x, mask_f, w)
    return out


def reference_jax(inputs, masks, weight):
    """Pure-JAX reference mirroring the PyTorch forward, for a correctness check."""
    w = jnp.asarray(weight, jnp.float32).reshape(-1)
    scores = jnp.einsum("bsd,d->bs", inputs, w)
    masked = jnp.where(masks, scores, jnp.float32(-100000000.0))
    return jax.nn.softmax(masked, axis=-1)


if __name__ == "__main__":
    # Small shapes consistent with the module: [bz, seq_len, dim].
    bz, seq_len, dim = 2, 8, 32

    key = jax.random.PRNGKey(0)
    k_x, k_w = jax.random.split(key)

    inputs = jax.random.normal(k_x, (bz, seq_len, dim), dtype=jnp.float32)
    # Mask: batch 0 has 6 valid tokens, batch 1 has 4 valid tokens.
    lengths = jnp.array([6, 4], dtype=jnp.int32)
    masks = jnp.arange(seq_len)[None, :] < lengths[:, None]    # bool [bz, seq_len]

    # PyTorch nn.Linear(dim, 1, bias=False).weight has shape [1, dim].
    weight = jax.random.normal(k_w, (1, dim), dtype=jnp.float32) / np.sqrt(dim)

    out = jax.block_until_ready(word_score(inputs, masks, weight))
    ref = jax.block_until_ready(reference_jax(inputs, masks, weight))

    assert out.shape == (bz, seq_len), out.shape
    np.testing.assert_allclose(np.asarray(out), np.asarray(ref), rtol=1e-5, atol=1e-6)
    np.testing.assert_allclose(np.asarray(out).sum(axis=-1), np.ones(bz),
                               rtol=1e-5, atol=1e-6)

    print("KERNEL_OK")
</pallas_src>

<mosaic_0001>
module attributes {stable_mosaic.version = 11 : i64} {
  func.func @word_score_kernel(%arg0: i32, %arg1: memref<2x8x32xf32, #tpu.memory_space<vmem>>, %arg2: memref<2x8xf32, #tpu.memory_space<vmem>>, %arg3: memref<1x32xf32, #tpu.memory_space<vmem>>, %arg4: memref<2x8xf32, #tpu.memory_space<vmem>>) attributes {dimension_semantics = [#tpu.dimension_semantics<parallel>], iteration_bounds = array<i64: 1>, scalar_prefetch = 0 : i64, scratch_operands = 0 : i64, tpu.core_type = #tpu.core_type<tc>, window_params = [{transform_indices = @transform_0, window_bounds = array<i64: 2, 8, 32>}, {transform_indices = @transform_1, window_bounds = array<i64: 2, 8>}, {pipeline_mode = #tpu.pipeline_mode<synchronous>, transform_indices = @transform_2, window_bounds = array<i64: 1, 32>}, {transform_indices = @transform_3, window_bounds = array<i64: 2, 8>}]} {
    %c0 = arith.constant 0 : index
    %c0_0 = arith.constant 0 : index
    %c0_1 = arith.constant 0 : index
    %0 = vector.load %arg1[%c0, %c0_0, %c0_1] : memref<2x8x32xf32, #tpu.memory_space<vmem>>, vector<2x8x32xf32>
    %c0_2 = arith.constant 0 : index
    %c0_3 = arith.constant 0 : index
    %1 = vector.load %arg3[%c0_2, %c0_3] : memref<1x32xf32, #tpu.memory_space<vmem>>, vector<1x32xf32>
    %c0_4 = arith.constant 0 : index
    %c0_5 = arith.constant 0 : index
    %2 = vector.load %arg2[%c0_4, %c0_5] : memref<2x8xf32, #tpu.memory_space<vmem>>, vector<2x8xf32>
    %3 = vector.shape_cast %1 : vector<1x32xf32> to vector<1x1x32xf32>
    %4 = vector.broadcast %3 : vector<1x1x32xf32> to vector<2x8x32xf32>
    %5 = arith.mulf %0, %4 : vector<2x8x32xf32>
    %cst = arith.constant dense<0.000000e+00> : vector<2x8xf32>
    %6 = vector.multi_reduction <add>, %5, %cst [2] : vector<2x8x32xf32> to vector<2x8xf32>
    %cst_6 = arith.constant 0.000000e+00 : f32
    %7 = vector.broadcast %cst_6 : f32 to vector<2x8xf32>
    %8 = arith.cmpf one, %2, %7 : vector<2x8xf32>
    %cst_7 = arith.constant -1.000000e+08 : f32
    %9 = vector.broadcast %cst_7 : f32 to vector<2x8xf32>
    %10 = arith.select %8, %6, %9 : vector<2x8xi1>, vector<2x8xf32>
    %cst_8 = arith.constant dense<0xFF800000> : vector<2xf32>
    %11 = vector.multi_reduction <maximumf>, %10, %cst_8 [1] : vector<2x8xf32> to vector<2xf32>
    %12 = vector.shape_cast %11 : vector<2xf32> to vector<2x1xf32>
    %13 = vector.broadcast %12 : vector<2x1xf32> to vector<2x8xf32>
    %14 = arith.subf %10, %13 : vector<2x8xf32>
    %15 = math.exp %14 : vector<2x8xf32>
    %cst_9 = arith.constant dense<0.000000e+00> : vector<2xf32>
    %16 = vector.multi_reduction <add>, %15, %cst_9 [1] : vector<2x8xf32> to vector<2xf32>
    %17 = vector.shape_cast %16 : vector<2xf32> to vector<2x1xf32>
    %18 = tpu.reciprocal %17 : vector<2x1xf32> -> vector<2x1xf32>
    %19 = vector.broadcast %18 : vector<2x1xf32> to vector<2x8xf32>
    %20 = arith.mulf %15, %19 : vector<2x8xf32>
    %c0_10 = arith.constant 0 : index
    %c0_11 = arith.constant 0 : index
    %21 = vector.load %arg4[%c0_10, %c0_11] : memref<2x8xf32, #tpu.memory_space<vmem>>, vector<2x8xf32>
    tpu.vector_store %arg4[%c0_10, %c0_11], %20 {strides = array<i32>} : memref<2x8xf32, #tpu.memory_space<vmem>>, vector<2x8xf32>,
    return
  }
  func.func @transform_0(%arg0: i32) -> (i32, i32, i32) {
    %c0_i32 = arith.constant 0 : i32
    %c0_i32_0 = arith.constant 0 : i32
    %c0_i32_1 = arith.constant 0 : i32
    return %arg0, %c0_i32, %c0_i32_0 : i32, i32, i32
  }
  func.func @transform_1(%arg0: i32) -> (i32, i32) {
    %c0_i32 = arith.constant 0 : i32
    %c0_i32_0 = arith.constant 0 : i32
    return %arg0, %c0_i32 : i32, i32
  }
  func.func @transform_2(%arg0: i32) -> (i32, i32) {
    %c0_i32 = arith.constant 0 : i32
    %c0_i32_0 = arith.constant 0 : i32
    %c0_i32_1 = arith.constant 0 : i32
    return %c0_i32, %c0_i32_0 : i32, i32
  }
  func.func @transform_3(%arg0: i32) -> (i32, i32) {
    %c0_i32 = arith.constant 0 : i32
    %c0_i32_0 = arith.constant 0 : i32
    return %arg0, %c0_i32 : i32, i32
  }
}

</mosaic_0001>

<llo_original>
// kernel: tpu_custom_call.1
$region0: #{tpu_custom_call.1}
  #allocation0 [shape = 'u32[]', space=smem, size = 0x4, offset = 0x4, fixed_abs, tag = 'smem constant byte address 0x4 - core index']
  #allocation1 [shape = 'u32[144,128]{1,0:T(1,128)}', space=vmem, size = 0x12000, scoped, tag = 'internal scratch']
  %s0 = inlined_call_operand.hbm [shape: f32[2,8,32], index: 0, kind: input, shape index: {}]
  %s1 = inlined_call_operand.hbm [shape: f32[2,8], index: 1, kind: input, shape index: {}]
  %s2 = inlined_call_operand.vmem [shape: f32[1,32], index: 2, kind: input, shape index: {}]
  %s3 = inlined_call_operand.hbm [shape: f32[2,8], index: 3, kind: output, shape index: {}]
  %s4 = sld [smem:[#allocation0]]
  $region30: #{tpu_custom_call.1} parent=0
    _
  %s6 = ssub.s32 1, %s4
  %s7 = scalar_select 0, %s6, %s4
  $region1: #{tpu_custom_call.1} parent=0
    #allocation2 [shape = 'u8[8192]{0}', space=vmem, size = 0x2000, scoped, tag = 'input window, operand 0, single buffered']
    #allocation3 [shape = 's32[1]{0}', space=sflag, size = 0x4, scoped, tag = 'scoped memory for tpu_custom_call.1']
    #allocation4 [shape = 's32[1]{0}', space=sflag, size = 0x4, scoped, tag = 'scoped memory for tpu_custom_call.1']
    #allocation5 [shape = 'u8[1024]{0}', space=vmem, size = 0x400, scoped, tag = 'input window, operand 1, single buffered']
    #allocation6 [shape = 's32[1]{0}', space=sflag, size = 0x4, scoped, tag = 'scoped memory for tpu_custom_call.1']
    #allocation7 [shape = 'u8[1024]{0}', space=vmem, size = 0x400, scoped, tag = 'output window, operand 0, single buffered']
    %8 = vsyncpa [#allocation3], 0
    %9 = vsyncpa [#allocation6], 0
    %10 = vsyncpa [#allocation4], 0
    // Predicated region
    $region2: #{tpu_custom_call.1} parent=1 // pred_check
      _
    $region3: #{tpu_custom_call.1} parent=1 // pred_check_branch
      %12 = sbr.rel (0) target = $region5
    $region4: #{tpu_custom_call.1} parent=1 // pred_region
      %s14 = ssub.s32 256, 256
      %15 = vsyncadd [#allocation3], %s14
      %s16 = sshll.u32 [#allocation2], 4
      %s17 = int_to_ptr.vmem [resolvable:$true] %s16
      %22 = dma.hbm_to_vmem [thread:$0]  %s0, 256, %s17, [#allocation3], 128, 128, 8
    $region5: #{tpu_custom_call.1} parent=1 // pred_fallthru
      _
    // Predicated region
    $region6: #{tpu_custom_call.1} parent=1 // pred_check
      _
    $region7: #{tpu_custom_call.1} parent=1 // pred_check_branch
      %24 = sbr.rel (0) target = $region9
    $region8: #{tpu_custom_call.1} parent=1 // pred_region
      %s26 = ssub.s32 32, 32
      %27 = vsyncadd [#allocation6], %s26
      %s29 = sshll.u32 [#allocation5], 4
      %s30 = int_to_ptr.vmem [resolvable:$true] %s29
      %32 = dma.hbm_to_vmem [thread:$0]  %s1, 32, %s30, [#allocation6]
    $region9: #{tpu_custom_call.1} parent=1 // pred_fallthru
      _
    // Predicated region
    $region10: #{tpu_custom_call.1} parent=1 // pred_check
      _
    $region11: #{tpu_custom_call.1} parent=1 // pred_check_branch
      %34 = sbr.rel (0) target = $region13
    $region12: #{tpu_custom_call.1} parent=1 // pred_region
      _
    $region13: #{tpu_custom_call.1} parent=1 // pred_fallthru
      _
    // Predicated region
    $region14: #{tpu_custom_call.1} parent=1 // pred_check
      _
    $region15: #{tpu_custom_call.1} parent=1 // pred_check_branch
      %36 = sbr.rel (0) target = $region17
    $region16: #{tpu_custom_call.1} parent=1 // pred_region
      %37 = dma.done [#allocation3], 256
    $region17: #{tpu_custom_call.1} parent=1 // pred_fallthru
      _
    // Predicated region
    $region18: #{tpu_custom_call.1} parent=1 // pred_check
      _
    $region19: #{tpu_custom_call.1} parent=1 // pred_check_branch
      %39 = sbr.rel (0) target = $region21
    $region20: #{tpu_custom_call.1} parent=1 // pred_region
      %40 = dma.done [#allocation6], 32
    $region21: #{tpu_custom_call.1} parent=1 // pred_fallthru
      _
    %v41 = vld [vmem:[#allocation2] sm:$0xff]
    %v42 = vld [vmem:[#allocation2 + $0x8] sm:$0xff]
    %v43 = vld [vmem:[%s2] sm:$0x1]
    %v44 = vld [vmem:[#allocation5] sm:$0x3]
    %v46 = vlaneseq
    %v47 = vshrl.u32 %v46, 7
    %v48 = vsub.s32 0, %v47
    %v49 = vrot.slane %v43, %v48
    %v51 = vmul.f32 %v41, %v49
    %v52 = vmul.f32 %v42, %v49
    %vm53 = vcmask 261120
    %v54 = vsel %vm53, %v51, 0.0
    %55 = vadd.xlane.f32.xlu0 %v54
    %v56 = vpop.xlane.xlu0 %55
    %v57 = vsel %vm53, %v52, 0.0
    %58 = vadd.xlane.f32.xlu0 %v57
    %v59 = vpop.xlane.xlu0 %58
    %vm60 = vcmp.ne.f32.partialorder %v44, 0.0
    %v63 = vlaneseq
    %v64 = vand.u32 %v63, 127
    %v65 = vlaneseq
    %v66 = vshrl.u32 %v65, 7
    %v67 = vsub.s32 %v64, %v66
    %v68 = vrot.slane %v56, %v67
    %v69 = vlaneseq
    %v70 = vshrl.u32 %v69, 7
    %v71 = vsub.s32 %v64, %v70
    %v72 = vrot.slane %v59, %v71
    %vm73 = vcmask 1041409
    %v74 = vsel %vm73, %v72, %v68
    %v76 = vsel %vm60, %v74, -1e+08
    %vm77 = vcmask 58368
    %v78 = vsel %vm77, %v76, -inf
    %79 = vmax.xlane.f32.xlu0 %v78
    %v80 = vpop.xlane.xlu0 %79
    %v81 = vsub.f32 %v76, %v80
    %v82 = vmul.f32 %v81, 1.442695
    %v83 = vpow.pop %v82
    %v84 = vsel %vm77, %v83, 0.0
    %85 = vadd.xlane.f32.xlu0 %v84
    %v86 = vpop.xlane.xlu0 %85
    %v87 = vrcp.pop %v86
    %v88 = vmul.f32 %v83, %v87
    %89 = vst.msk [vmem:[#allocation7] sm:$0x3] %vm77, %v88
    // Predicated region
    $region22: #{tpu_custom_call.1} parent=1 // pred_check
      _
    $region23: #{tpu_custom_call.1} parent=1 // pred_check_branch
      %91 = sbr.rel (0) target = $region25
    $region24: #{tpu_custom_call.1} parent=1 // pred_region
      %s93 = ssub.s32 32, 32
      %94 = vsyncadd [#allocation4], %s93
      %s96 = sshll.u32 [#allocation7], 4
      %s97 = int_to_ptr.vmem [resolvable:$true] %s96
      %99 = dma.vmem_to_hbm [thread:$0]  %s97, 32, %s3, [#allocation4]
    $region25: #{tpu_custom_call.1} parent=1 // pred_fallthru
      _
    // Predicated region
    $region26: #{tpu_custom_call.1} parent=1 // pred_check
      _
    $region27: #{tpu_custom_call.1} parent=1 // pred_check_branch
      %101 = sbr.rel (0) target = $region29
    $region28: #{tpu_custom_call.1} parent=1 // pred_region
      %102 = dma.done [#allocation4], 32
    $region29: #{tpu_custom_call.1} parent=1 // pred_fallthru
      _
    %103 = vsyncpa [#allocation3], 1
    %104 = vsyncpa [#allocation6], 1
    %105 = vsyncpa [#allocation4], 1

</llo_original>
